<compile_context>
chip_gen: v5e
topology: v5e:2x2
jax: 0.10.0
libtpu: 0.0.40
codegen_flags: <defaults>
</compile_context>

<pallas_src>
import functools

import jax
import jax.numpy as jnp
from jax.experimental import pallas as pl
from jax.experimental.pallas import tpu as pltpu


# Cap on the static per-batch-element unroll inside one grid step; keeps code
# size / compile time bounded while still amortizing the ~0.35 us per-step cost.
_MAX_BATCH_UNROLL = 16


def se_kernel(x_ref, w1_ref, w2_ref, o_ref):
    """Single-pass SE: x_ref/o_ref: (bt, C, HW) with HW on lanes.

    w1_ref: (C//r, C), w2_ref: (C, C//r)  -- PyTorch nn.Linear (out, in) layout,
    used as LHS of column-vector matmuls so no transposes/relayouts are needed.
    """
    bt, _, hw = x_ref.shape
    inv_hw = 1.0 / hw
    for b in range(bt):  # static unroll; bt is kept small by the wrapper
        # --- squeeze: mean over the spatial (lane) axis, f32 accumulation ---
        y = jnp.sum(x_ref[b], axis=-1, keepdims=True, dtype=jnp.float32) * inv_hw  # (C, 1)
        # --- excitation: fc1 -> relu -> fc2 -> hsigmoid (f32 accumulation) ---
        y = y.astype(w1_ref.dtype)
        hid = jnp.dot(w1_ref[...], y, preferred_element_type=jnp.float32)          # (Cr, 1)
        hid = jnp.maximum(hid, 0.0).astype(w2_ref.dtype)
        gate = jnp.dot(w2_ref[...], hid, preferred_element_type=jnp.float32)       # (C, 1)
        gate = (jnp.clip(gate + 3.0, 0.0, 6.0) * (1.0 / 6.0)).astype(x_ref.dtype)
        # --- scale: broadcast the channel gate over spatial lanes (VPU) ---
        o_ref[b] = (x_ref[b] * gate).astype(o_ref.dtype)


def se_pool_gate_kernel(x_ref, w1_ref, w2_ref, g_ref, acc_ref, *, hw_total, hw_tile):
    """Fallback pass 1: pooled gate per batch element, HW tiled on the grid.

    x_ref: (1, C, hw_tile); g_ref: (1, C, 1); acc_ref: (C, 1) f32 VMEM scratch.
    Grid = (B, num_hw_tiles) with the HW axis last ("arbitrary" reduction).
    """
    h = pl.program_id(1)

    @pl.when(h == 0)
    def _():
        acc_ref[...] = jnp.zeros_like(acc_ref)

    x = x_ref[0]                                                    # (C, hw_tile)
    # Mask lanes past the true spatial extent (last, possibly padded, block).
    lane = jax.lax.broadcasted_iota(jnp.int32, x.shape, 1)
    x = jnp.where(h * hw_tile + lane < hw_total, x, jnp.zeros_like(x))
    acc_ref[...] += jnp.sum(x, axis=-1, keepdims=True, dtype=jnp.float32)

    @pl.when(h == pl.num_programs(1) - 1)
    def _():
        y = (acc_ref[...] * (1.0 / hw_total)).astype(w1_ref.dtype)              # (C, 1)
        hid = jnp.dot(w1_ref[...], y, preferred_element_type=jnp.float32)       # (Cr, 1)
        hid = jnp.maximum(hid, 0.0).astype(w2_ref.dtype)
        gate = jnp.dot(w2_ref[...], hid, preferred_element_type=jnp.float32)    # (C, 1)
        gate = jnp.clip(gate + 3.0, 0.0, 6.0) * (1.0 / 6.0)
        g_ref[0] = gate.astype(g_ref.dtype)


def se_scale_kernel(x_ref, g_ref, o_ref):
    """Fallback pass 2: out = x * gate, HW tiled. Gate broadcasts over lanes."""
    o_ref[...] = (x_ref[...] * g_ref[...].astype(x_ref.dtype)).astype(o_ref.dtype)


def _vmem_budgets(vmem_data_budget):
    """Generation-aware (data budget, vmem limit) in bytes."""
    try:
        cap = int(pltpu.get_tpu_info().vmem_capacity_bytes)
    except Exception:
        cap = 64 * 1024 * 1024  # conservative default (v7x per-TensorCore VMEM)
    if vmem_data_budget is None:
        if cap >= 128 * 1024 * 1024:          # v5e / v6e: big tiles, few steps
            vmem_data_budget = 64 * 1024 * 1024
        else:                                  # v7x: 64 MiB per TensorCore
            vmem_data_budget = int(0.35 * cap)
    vmem_limit = min(int(0.75 * cap), 100 * 1024 * 1024)
    return vmem_data_budget, vmem_limit


def se_module(x_nchw, w1, w2, *, vmem_data_budget=None):
    """SEModule forward.

    x_nchw: (B, C, H, W).  w1: (C//r, C), w2: (C, C//r) in PyTorch nn.Linear
    (out_features, in_features) layout -- no transposes needed anywhere.
    """
    B, C, H, W = x_nchw.shape
    HW = H * W
    x = x_nchw.reshape(B, C, HW)            # free reshape, no relayout HBM pass
    # TODO(synk): for late-stage SE blocks with HW < 128 and C >= 128, a
    # channels-on-lanes layout would give denser output stores, but the NCHW
    # relayout it requires costs more HBM traffic than the masked stores save.

    data_budget, vmem_limit = _vmem_budgets(vmem_data_budget)
    itemsize = x.dtype.itemsize
    slab = C * HW * itemsize                 # one batch element (input OR output)

    if 4 * slab <= data_budget:
        # ---------------- single-pass path: whole (C, HW) slab per element ----
        bt = max(1, min(B, data_budget // (4 * slab), _MAX_BATCH_UNROLL))
        if B >= 4:
            bt = min(bt, B // 4)             # >=4 grid steps -> >=2 per v7x core
        elif B >= 2:
            bt = min(bt, B // 2)             # >=2 grid steps so both cores work
        grid = (pl.cdiv(B, bt),)             # cdiv grid; last block may be padded

        out = pl.pallas_call(
            se_kernel,
            out_shape=jax.ShapeDtypeStruct((B, C, HW), x.dtype),
            grid_spec=pltpu.PrefetchScalarGridSpec(
                num_scalar_prefetch=0,
                grid=grid,
                in_specs=[
                    pl.BlockSpec((bt, C, HW), lambda b: (b, 0, 0)),   # x batch tile
                    pl.BlockSpec(w1.shape, lambda b: (0, 0)),          # fc1 weight
                    pl.BlockSpec(w2.shape, lambda b: (0, 0)),          # fc2 weight
                ],
                out_specs=pl.BlockSpec((bt, C, HW), lambda b: (b, 0, 0)),
            ),
            compiler_params=pltpu.CompilerParams(
                dimension_semantics=("parallel",),
                vmem_limit_bytes=vmem_limit,
            ),
        )(x, w1, w2)
    else:
        # ---------------- two-pass fallback: slab too big for VMEM ------------
        # Pass 1: HW-tiled pool + gate (per batch element).  Pass 2: HW-tiled scale.
        hw_t = min(HW, max(128, (data_budget // (4 * C * itemsize)) // 128 * 128))
        n_hw = pl.cdiv(HW, hw_t)

        gate = pl.pallas_call(
            functools.partial(se_pool_gate_kernel, hw_total=HW, hw_tile=hw_t),
            out_shape=jax.ShapeDtypeStruct((B, C, 1), x.dtype),
            grid_spec=pltpu.PrefetchScalarGridSpec(
                num_scalar_prefetch=0,
                grid=(B, n_hw),
                in_specs=[
                    pl.BlockSpec((1, C, hw_t), lambda b, h: (b, 0, h)),
                    pl.BlockSpec(w1.shape, lambda b, h: (0, 0)),
                    pl.BlockSpec(w2.shape, lambda b, h: (0, 0)),
                ],
                out_specs=pl.BlockSpec((1, C, 1), lambda b, h: (b, 0, 0)),
                scratch_shapes=[pltpu.VMEM((C, 1), jnp.float32)],
            ),
            compiler_params=pltpu.CompilerParams(
                dimension_semantics=("parallel", "arbitrary"),
                vmem_limit_bytes=vmem_limit,
            ),
        )(x, w1, w2)

        out = pl.pallas_call(
            se_scale_kernel,
            out_shape=jax.ShapeDtypeStruct((B, C, HW), x.dtype),
            grid_spec=pltpu.PrefetchScalarGridSpec(
                num_scalar_prefetch=0,
                grid=(B, n_hw),
                in_specs=[
                    pl.BlockSpec((1, C, hw_t), lambda b, h: (b, 0, h)),
                    pl.BlockSpec((1, C, 1), lambda b, h: (b, 0, 0)),
                ],
                out_specs=pl.BlockSpec((1, C, hw_t), lambda b, h: (b, 0, h)),
            ),
            compiler_params=pltpu.CompilerParams(
                dimension_semantics=("parallel", "parallel"),
                vmem_limit_bytes=vmem_limit,
            ),
        )(x, gate)

    return out.reshape(B, C, H, W)           # free reshape back to NCHW


def se_module_ref(x, w1, w2):
    """Pure-JAX reference mirroring the PyTorch forward (torch weight layout)."""
    y = jnp.mean(x, axis=(2, 3))                              # (B, C) adaptive avg pool
    y = jnp.maximum(y @ w1.T, 0.0)                            # fc1 + relu
    y = jnp.clip(y @ w2.T + 3.0, 0.0, 6.0) / 6.0              # fc2 + hsigmoid
    return x * y[:, :, None, None]


if __name__ == "__main__":
    B, C, H, W = 2, 4, 16, 16
    reduction = 4
    Cr = max(1, C // reduction)   # = 1

    key = jax.random.PRNGKey(0)
    kx, k1, k2 = jax.random.split(key, 3)
    x = jax.random.normal(kx, (B, C, H, W), dtype=jnp.float32)

    # PyTorch nn.Linear weights in their native (out_features, in_features) layout.
    w1 = jax.random.normal(k1, (Cr, C), dtype=jnp.float32) * 0.5   # fc1: (C//r, C)
    w2 = jax.random.normal(k2, (C, Cr), dtype=jnp.float32) * 0.5   # fc2: (C, C//r)

    ref = se_module_ref(x, w1, w2)

    # Main single-pass path.
    out = jax.block_until_ready(se_module(x, w1, w2))
    assert out.shape == (B, C, H, W)
    assert jnp.allclose(out, ref, atol=1e-5, rtol=1e-5)

    # Exercise the two-pass fallback (forced tiny VMEM data budget).
    out2 = jax.block_until_ready(se_module(x, w1, w2, vmem_data_budget=1024))
    assert out2.shape == (B, C, H, W)
    assert jnp.allclose(out2, ref, atol=1e-5, rtol=1e-5)

    print("KERNEL_OK")
</pallas_src>

<mosaic_0001>
module attributes {stable_mosaic.version = 11 : i64} {
  func.func @se_kernel(%arg0: i32, %arg1: memref<1x4x256xf32, #tpu.memory_space<vmem>>, %arg2: memref<1x4xf32, #tpu.memory_space<vmem>>, %arg3: memref<4x1xf32, #tpu.memory_space<vmem>>, %arg4: memref<1x4x256xf32, #tpu.memory_space<vmem>>) attributes {dimension_semantics = [#tpu.dimension_semantics<parallel>], iteration_bounds = array<i64: 2>, scalar_prefetch = 0 : i64, scratch_operands = 0 : i64, tpu.core_type = #tpu.core_type<tc>, window_params = [{transform_indices = @transform_0, window_bounds = array<i64: 1, 4, 256>}, {pipeline_mode = #tpu.pipeline_mode<synchronous>, transform_indices = @transform_1, window_bounds = array<i64: 1, 4>}, {pipeline_mode = #tpu.pipeline_mode<synchronous>, transform_indices = @transform_2, window_bounds = array<i64: 4, 1>}, {transform_indices = @transform_3, window_bounds = array<i64: 1, 4, 256>}]} {
    %c0 = arith.constant 0 : index
    %c0_0 = arith.constant 0 : index
    %c0_1 = arith.constant 0 : index
    %0 = vector.load %arg1[%c0, %c0_0, %c0_1] : memref<1x4x256xf32, #tpu.memory_space<vmem>>, vector<1x4x256xf32>
    %1 = vector.shape_cast %0 : vector<1x4x256xf32> to vector<4x256xf32>
    %cst = arith.constant dense<0.000000e+00> : vector<4xf32>
    %2 = vector.multi_reduction <add>, %1, %cst [1] : vector<4x256xf32> to vector<4xf32>
    %3 = vector.shape_cast %2 : vector<4xf32> to vector<4x1xf32>
    %cst_2 = arith.constant 3.906250e-03 : f32
    %4 = vector.broadcast %cst_2 : f32 to vector<4x1xf32>
    %5 = arith.mulf %3, %4 : vector<4x1xf32>
    %c0_3 = arith.constant 0 : index
    %c0_4 = arith.constant 0 : index
    %6 = vector.load %arg2[%c0_3, %c0_4] : memref<1x4xf32, #tpu.memory_space<vmem>>, vector<1x4xf32>
    %cst_5 = arith.constant dense<0.000000e+00> : vector<1x1xf32>
    %7 = tpu.matmul %6, %5, %cst_5 {dimension_numbers = #tpu.dot_dimension_numbers<[1], [0], [0], [1], [0, 0, 1, 1], [], []>} : vector<1x4xf32>, vector<4x1xf32>, vector<1x1xf32> -> vector<1x1xf32>
    %cst_6 = arith.constant 0.000000e+00 : f32
    %8 = vector.broadcast %cst_6 : f32 to vector<1x1xf32>
    %9 = arith.maximumf %7, %8 : vector<1x1xf32>
    %c0_7 = arith.constant 0 : index
    %c0_8 = arith.constant 0 : index
    %10 = vector.load %arg3[%c0_7, %c0_8] : memref<4x1xf32, #tpu.memory_space<vmem>>, vector<4x1xf32>
    %cst_9 = arith.constant dense<0.000000e+00> : vector<4x1xf32>
    %11 = tpu.matmul %10, %9, %cst_9 {dimension_numbers = #tpu.dot_dimension_numbers<[1], [0], [0], [1], [0, 0, 1, 1], [], []>} : vector<4x1xf32>, vector<1x1xf32>, vector<4x1xf32> -> vector<4x1xf32>
    %cst_10 = arith.constant 3.000000e+00 : f32
    %12 = vector.broadcast %cst_10 : f32 to vector<4x1xf32>
    %13 = arith.addf %11, %12 : vector<4x1xf32>
    %cst_11 = arith.constant 0.000000e+00 : f32
    %cst_12 = arith.constant 6.000000e+00 : f32
    %14 = vector.broadcast %cst_11 : f32 to vector<4x1xf32>
    %15 = arith.maximumf %14, %13 : vector<4x1xf32>
    %16 = vector.broadcast %cst_12 : f32 to vector<4x1xf32>
    %17 = arith.minimumf %16, %15 : vector<4x1xf32>
    %cst_13 = arith.constant 0.166666672 : f32
    %18 = vector.broadcast %cst_13 : f32 to vector<4x1xf32>
    %19 = arith.mulf %17, %18 : vector<4x1xf32>
    %c0_14 = arith.constant 0 : index
    %c0_15 = arith.constant 0 : index
    %c0_16 = arith.constant 0 : index
    %20 = vector.load %arg1[%c0_14, %c0_15, %c0_16] : memref<1x4x256xf32, #tpu.memory_space<vmem>>, vector<1x4x256xf32>
    %21 = vector.shape_cast %20 : vector<1x4x256xf32> to vector<4x256xf32>
    %22 = vector.broadcast %19 : vector<4x1xf32> to vector<4x256xf32>
    %23 = arith.mulf %21, %22 : vector<4x256xf32>
    %c0_17 = arith.constant 0 : index
    %c0_18 = arith.constant 0 : index
    %c0_19 = arith.constant 0 : index
    %24 = vector.load %arg4[%c0_17, %c0_18, %c0_19] : memref<1x4x256xf32, #tpu.memory_space<vmem>>, vector<1x4x256xf32>
    %25 = vector.shape_cast %24 : vector<1x4x256xf32> to vector<4x256xf32>
    %26 = vector.shape_cast %23 : vector<4x256xf32> to vector<1x4x256xf32>
    tpu.vector_store %arg4[%c0_17, %c0_18, %c0_19], %26 {strides = array<i32>} : memref<1x4x256xf32, #tpu.memory_space<vmem>>, vector<1x4x256xf32>,
    return
  }
  func.func @transform_0(%arg0: i32) -> (i32, i32, i32) {
    %c0_i32 = arith.constant 0 : i32
    %c0_i32_0 = arith.constant 0 : i32
    %c0_i32_1 = arith.constant 0 : i32
    return %arg0, %c0_i32, %c0_i32_0 : i32, i32, i32
  }
  func.func @transform_1(%arg0: i32) -> (i32, i32) {
    %c0_i32 = arith.constant 0 : i32
    %c0_i32_0 = arith.constant 0 : i32
    %c0_i32_1 = arith.constant 0 : i32
    return %c0_i32, %c0_i32_0 : i32, i32
  }
  func.func @transform_2(%arg0: i32) -> (i32, i32) {
    %c0_i32 = arith.constant 0 : i32
    %c0_i32_0 = arith.constant 0 : i32
    %c0_i32_1 = arith.constant 0 : i32
    return %c0_i32, %c0_i32_0 : i32, i32
  }
  func.func @transform_3(%arg0: i32) -> (i32, i32, i32) {
    %c0_i32 = arith.constant 0 : i32
    %c0_i32_0 = arith.constant 0 : i32
    %c0_i32_1 = arith.constant 0 : i32
    return %arg0, %c0_i32, %c0_i32_0 : i32, i32, i32
  }
}

</mosaic_0001>

<llo_original>
// kernel: tpu_custom_call.1
$region0: #{tpu_custom_call.1}
  #allocation0 [shape = 'u32[]', space=smem, size = 0x4, offset = 0x4, fixed_abs, tag = 'smem constant byte address 0x4 - core index']
  #allocation1 [shape = 'u32[72,128]{1,0:T(1,128)}', space=vmem, size = 0x9000, scoped, tag = 'internal scratch']
  %s0 = inlined_call_operand.hbm [shape: f32[2,4,256], index: 0, kind: input, shape index: {}]
  %s1 = inlined_call_operand.vmem [shape: f32[1,4], index: 1, kind: input, shape index: {}]
  %s2 = inlined_call_operand.vmem [shape: f32[4,1], index: 2, kind: input, shape index: {}]
  %s3 = inlined_call_operand.hbm [shape: f32[2,4,256], index: 3, kind: output, shape index: {}]
  %s4 = sld [smem:[#allocation0]]
  $region49: #{tpu_custom_call.1} parent=0
    _
  %s6 = ssub.s32 1, %s4
  %s7 = scalar_select 0, %s6, %s4
  $region1: #{tpu_custom_call.1} parent=0
    #allocation2 [shape = 'u8[8192]{0}', space=vmem, size = 0x2000, scoped, tag = 'input window, operand 0']
    #allocation3 [shape = 's32[2]{0}', space=sflag, size = 0x8, scoped, tag = 'scoped memory for tpu_custom_call.1']
    #allocation4 [shape = 's32[2]{0}', space=sflag, size = 0x8, scoped, tag = 'scoped memory for tpu_custom_call.1']
    #allocation5 [shape = 'u8[8192]{0}', space=vmem, size = 0x2000, scoped, tag = 'output window, operand 0']
    %8 = vsyncpa [#allocation3], 0
    %s9 = scalar_lea.sflag [#allocation3], 1
    %10 = vsyncpa %s9, 0
    %11 = vsyncpa [#allocation4], 0
    %s12 = scalar_lea.sflag [#allocation4], 1
    %13 = vsyncpa %s12, 0
    loop: start=0, step=1, limit=4
    $region2: #{tpu_custom_call.1} parent=1 // loop_pre_header
      _
    $region3: #{tpu_custom_call.1} parent=1 // loop_header
      %s15 = sphi 0, %s19
      %p16 = scmp.ge.s32.totalorder %s15, 4
      %s25 = sphi 0, %s27
      %s28 = sphi 0, %s25
      %s29 = sphi 0, %s28
      %s45 = sphi 0, %s29
      %s49 = sphi 0, %s49
      %s51 = sphi 0, %s49
      %s52 = sphi 0, %s51
      %s66 = sphi 0, %s52
      %s70 = sphi 0, %s70
      %s72 = sphi 0, %s70
      %s73 = sphi 0, %s72
      %s87 = sphi 0, %s73
      %s93 = sphi 0, %s95
      %s96 = sphi 0, %s93
      %s97 = sphi 0, %s96
      %s113 = sphi 0, %s97
    $region4: #{tpu_custom_call.1} parent=1 // loop_header_branch
      %18 = sbr.rel (%p16) target = $region8
    $region5: #{tpu_custom_call.1} parent=1 // loop_body
      %s20 = ssub.s32 %s15, 1
      %s21 = ssub.s32 %s15, 2
      %s22 = sadd.s32 %s15, 1
      %s23 = ssub.s32 %s15, %s22
      %p24 = scmp.eq.s32.totalorder %s23, 0
      %s26 = sadd.s32 %s25, 1
      %s27 = scalar_select %p24, %s25, %s26
      %p30 = pneg %p24
      %p31 = scmp.eq.s32.totalorder %s15, 1
      %p32 = por %p30, %p31
      %p33 = scmp.ne.s32.totalorder %s25, %s28
      %p34 = scmp.eq.s32.totalorder %s15, 0
      %p35 = por %p33, %p34
      %p36 = scmp.ne.s32.totalorder %s25, %s28
      %p37 = scmp.eq.s32.totalorder %s20, 1
      %p38 = por %p36, %p37
      %p39 = scmp.ne.s32.totalorder %s28, %s29
      %p40 = scmp.eq.s32.totalorder %s20, 0
      %p41 = por %p39, %p40
      %p42 = scmp.ne.s32.totalorder %s28, %s29
      %p43 = scmp.eq.s32.totalorder %s21, 1
      %p44 = por %p42, %p43
      %p46 = scmp.ne.s32.totalorder %s29, %s45
      %p47 = scmp.eq.s32.totalorder %s21, 0
      %p48 = por %p46, %p47
      %s50 = sadd.s32 %s49, 1
      %p53 = scmp.eq.s32.totalorder %s15, 1
      %p54 = scmp.ne.s32.totalorder %s49, %s51
      %p55 = scmp.eq.s32.totalorder %s15, 0
      %p56 = por %p54, %p55
      %p57 = scmp.ne.s32.totalorder %s49, %s51
      %p58 = scmp.eq.s32.totalorder %s20, 1
      %p59 = por %p57, %p58
      %p60 = scmp.ne.s32.totalorder %s51, %s52
      %p61 = scmp.eq.s32.totalorder %s20, 0
      %p62 = por %p60, %p61
      %p63 = scmp.ne.s32.totalorder %s51, %s52
      %p64 = scmp.eq.s32.totalorder %s21, 1
      %p65 = por %p63, %p64
      %p67 = scmp.ne.s32.totalorder %s52, %s66
      %p68 = scmp.eq.s32.totalorder %s21, 0
      %p69 = por %p67, %p68
      %s71 = sadd.s32 %s70, 1
      %p74 = scmp.eq.s32.totalorder %s15, 1
      %p75 = scmp.ne.s32.totalorder %s70, %s72
      %p76 = scmp.eq.s32.totalorder %s15, 0
      %p77 = por %p75, %p76
      %p78 = scmp.ne.s32.totalorder %s70, %s72
      %p79 = scmp.eq.s32.totalorder %s20, 1
      %p80 = por %p78, %p79
      %p81 = scmp.ne.s32.totalorder %s72, %s73
      %p82 = scmp.eq.s32.totalorder %s20, 0
      %p83 = por %p81, %p82
      %p84 = scmp.ne.s32.totalorder %s72, %s73
      %p85 = scmp.eq.s32.totalorder %s21, 1
      %p86 = por %p84, %p85
      %p88 = scmp.ne.s32.totalorder %s73, %s87
      %p89 = scmp.eq.s32.totalorder %s21, 0
      %p90 = por %p88, %p89
      %s91 = ssub.s32 %s15, %s22
      %p92 = scmp.eq.s32.totalorder %s91, 0
      %s94 = sadd.s32 %s93, 1
      %s95 = scalar_select %p92, %s93, %s94
      %p98 = pneg %p92
      %p99 = scmp.eq.s32.totalorder %s15, 1
      %p100 = por %p98, %p99
      %p101 = scmp.ne.s32.totalorder %s93, %s96
      %p102 = scmp.eq.s32.totalorder %s15, 0
      %p103 = por %p101, %p102
      %p104 = scmp.ne.s32.totalorder %s93, %s96
      %p105 = scmp.eq.s32.totalorder %s20, 1
      %p106 = por %p104, %p105
      %p107 = scmp.ne.s32.totalorder %s96, %s97
      %p108 = scmp.eq.s32.totalorder %s20, 0
      %p109 = por %p107, %p108
      %p110 = scmp.ne.s32.totalorder %s96, %s97
      %p111 = scmp.eq.s32.totalorder %s21, 1
      %p112 = por %p110, %p111
      %p114 = scmp.ne.s32.totalorder %s97, %s113
      %p115 = scmp.eq.s32.totalorder %s21, 0
      %p116 = por %p114, %p115
      %p117 = scmp.le.s32.totalorder 1, %s15
      %p118 = scmp.lt.s32.totalorder %s15, 3
      %p119 = pnand %p117, %p118
      %p120 = pneg %p119
      // Predicated region
      $region9: #{tpu_custom_call.1} parent=5 // pred_check
        _
      $region10: #{tpu_custom_call.1} parent=5 // pred_check_branch
        %122 = sbr.rel (%p119) target = $region12
      $region11: #{tpu_custom_call.1} parent=5 // pred_region
        %s123 = ssub.s32 %s15, 1
        // Predicated region
        $region13: #{tpu_custom_call.1} parent=11 // pred_check
          %p124 = pneg %p62
        $region14: #{tpu_custom_call.1} parent=11 // pred_check_branch
          %126 = sbr.rel (%p124) target = $region16
        $region15: #{tpu_custom_call.1} parent=11 // pred_region
          _
        $region16: #{tpu_custom_call.1} parent=11 // pred_fallthru
          _
        // Predicated region
        $region17: #{tpu_custom_call.1} parent=11 // pred_check
          %p127 = pneg %p83
        $region18: #{tpu_custom_call.1} parent=11 // pred_check_branch
          %129 = sbr.rel (%p127) target = $region20
        $region19: #{tpu_custom_call.1} parent=11 // pred_region
          _
        $region20: #{tpu_custom_call.1} parent=11 // pred_fallthru
          _
      $region12: #{tpu_custom_call.1} parent=5 // pred_fallthru
        _
      %p130 = scmp.lt.s32.totalorder %s15, 2
      // Predicated region
      $region21: #{tpu_custom_call.1} parent=5 // pred_check
        %p131 = pneg %p130
      $region22: #{tpu_custom_call.1} parent=5 // pred_check_branch
        %133 = sbr.rel (%p131) target = $region24
      $region23: #{tpu_custom_call.1} parent=5 // pred_region
        // Predicated region
        $region25: #{tpu_custom_call.1} parent=23 // pred_check
          %p134 = pneg %p35
        $region26: #{tpu_custom_call.1} parent=23 // pred_check_branch
          %136 = sbr.rel (%p134) target = $region28
        $region27: #{tpu_custom_call.1} parent=23 // pred_region
          %s137 = sand.u32 %s25, 1
          %s138 = scalar_lea.sflag [#allocation3], %s137
          %s139 = sand.u32 %s25, 1
          %s140 = smul.addr %s139, 8
          %s141 = scalar_lea.vmem [#allocation2], %s140
          %143 = vsyncadd %s138, 0
          %s144 = smul.addr %s15, 2
          %s145 = smul.addr %s144, 4
          %s146 = scalar_lea.hbm %s0, %s145
          %s148 = sshll.u32 %s146, 4
          %s149 = int_to_ptr.hbm [resolvable:$true] %s148
          %s150 = sshll.u32 %s141, 4
          %s151 = int_to_ptr.vmem [resolvable:$true] %s150
          %153 = dma.hbm_to_vmem [thread:$0]  %s149, 128, %s151, %s138
        $region28: #{tpu_custom_call.1} parent=23 // pred_fallthru
          _
      $region24: #{tpu_custom_call.1} parent=5 // pred_fallthru
        _
      %p154 = scmp.le.s32.totalorder 1, %s15
      %p155 = scmp.lt.s32.totalorder %s15, 3
      %p156 = pnand %p154, %p155
      %p157 = pneg %p156
      // Predicated region
      $region29: #{tpu_custom_call.1} parent=5 // pred_check
        _
      $region30: #{tpu_custom_call.1} parent=5 // pred_check_branch
        %159 = sbr.rel (%p156) target = $region32
      $region31: #{tpu_custom_call.1} parent=5 // pred_region
        %s160 = ssub.s32 %s15, 1
        %s161 = sand.u32 %s28, 1
        %s162 = scalar_lea.sflag [#allocation3], %s161
        %s163 = sand.u32 %s28, 1
        %s164 = smul.addr %s163, 8
        %s165 = scalar_lea.vmem [#allocation2], %s164
        // Predicated region
        $region33: #{tpu_custom_call.1} parent=31 // pred_check
          %p166 = pneg %p41
        $region34: #{tpu_custom_call.1} parent=31 // pred_check_branch
          %168 = sbr.rel (%p166) target = $region36
        $region35: #{tpu_custom_call.1} parent=31 // pred_region
          %170 = dma.done %s162, 128
        $region36: #{tpu_custom_call.1} parent=31 // pred_fallthru
          _
        %s171 = sand.u32 %s28, 1
        %s172 = scalar_lea.sflag [#allocation3], %s171
        %s173 = sand.u32 %s28, 1
        %s174 = smul.addr %s173, 8
        %s175 = scalar_lea.vmem [#allocation2], %s174
        %p176 = pneg %p41
        %p177 = pneg %p38
        %p178 = pneg %p62
        %p179 = pneg %p59
        %p180 = pneg %p83
        %p181 = pneg %p80
        %p182 = pneg %p109
        %p183 = pneg %p106
        %s184 = sand.u32 %s96, 1
        %s185 = scalar_lea.sflag [#allocation4], %s184
        %s186 = sand.u32 %s96, 1
        %s187 = smul.addr %s186, 8
        %s188 = scalar_lea.vmem [#allocation5], %s187
        %v189 = vld [vmem:[%s165] sm:$0xff]
        %191 = vst [vmem:[#allocation1] ss:$2 sm:$0xff] %v189
        %v192 = vld.sshfl [vmem:[#allocation1] sm:$0xff pattern:$0x75316420]
        %v193 = vld.sshfl [vmem:[#allocation1 + $0x8] sm:$0xff pattern:$0x75316420]
        %vm196 = vcmask 1043456
        %v197 = vsel %vm196, %v192, 0.0
        %v198 = vsel %vm196, %v193, 0.0
        %v199 = vadd.f32 %v197, %v198
        %200 = vadd.xlane.f32.xlu0 %v199
        %v201 = vpop.xlane.xlu0 %200
        %v202 = vmul.f32 %v201, 0.00390625
        %v203 = vld [vmem:[%s1] sm:$0x1]
        %vm204 = vcmask 31744
        %v206 = vsel %vm204, %v203, 0
        %v209 = vsel %vm196, %v202, 0
        %211 = vmatpush.msra.mxu0 0.0
        %212 = vmatpush.msra.mxu0 0.0
        %213 = vmatpush.msra.mxu0 0.0
        %214 = vmatpush.msra.mxu0 0.0
        %215 = vmatpush.msra.mxu0 0.0
        %216 = vmatpush.msra.mxu0 0.0
        %217 = vmatpush.msra.mxu0 0.0
        %218 = vmatpush.msra.mxu0 0.0
        %219 = vmatpush.msra.mxu0 0.0
        %220 = vmatpush.msra.mxu0 0.0
        %221 = vmatpush.msra.mxu0 0.0
        %222 = vmatpush.msra.mxu0 0.0
        %223 = vmatpush.msra.mxu0 0.0
        %224 = vmatpush.msra.mxu0 0.0
        %225 = vmatpush.msra.mxu0 0.0
        %226 = vmatpush.msra.mxu0 %v209
        %227 = vmatmul.f32.gmra.mxu0 %v206
        %v228 = vpop.f32.mrf.mxu0
        %v229 = vadd.f32 0.0, %v228
        %230 = vdwg.mxu0
        %v231 = vmax.f32 %v229, 0.0
        %v232 = vld [vmem:[%s2] sm:$0xf]
        %vm233 = vcmask 7168
        %v235 = vsel %vm233, %v232, 0
        %vm237 = vcmask 1040384
        %v239 = vsel %vm237, %v231, 0
        %241 = vmatpush.msra.mxu0 0.0
        %242 = vmatpush.msra.mxu0 0.0
        %243 = vmatpush.msra.mxu0 0.0
        %244 = vmatpush.msra.mxu0 0.0
        %245 = vmatpush.msra.mxu0 0.0
        %246 = vmatpush.msra.mxu0 0.0
        %247 = vmatpush.msra.mxu0 0.0
        %248 = vmatpush.msra.mxu0 0.0
        %249 = vmatpush.msra.mxu0 0.0
        %250 = vmatpush.msra.mxu0 0.0
        %251 = vmatpush.msra.mxu0 0.0
        %252 = vmatpush.msra.mxu0 0.0
        %253 = vmatpush.msra.mxu0 0.0
        %254 = vmatpush.msra.mxu0 0.0
        %255 = vmatpush.msra.mxu0 0.0
        %256 = vmatpush.msra.mxu0 %v239
        %257 = vmatmul.f32.gmra.mxu0 %v235
        %v258 = vpop.f32.mrf.mxu0
        %v259 = vadd.f32 3.0, %v258
        %260 = vdwg.mxu0
        %v261 = vmax.f32 %v259, 0.0
        %v262 = vmin.f32 %v261, 6.0
        %v263 = vmul.f32 %v262, 0.16666667
        %265 = vset.pattern.permute.xlu0 0
        %266 = vperm.xlu0 %265, %v263
        %v267 = vpop.permute.xlu0 %266
        %v269 = vunpack.c.l.s4 839922192
        %v270 = vunpack.c.0.s8 %v269
        %v271 = vperm.slane %v267, %v270
        %v273 = vmul.f32 %v189, %v271
        %274 = vst [vmem:[%s188] sm:$0xff] %v273
        %s275 = sand.u32 %s96, 1
        %s276 = scalar_lea.sflag [#allocation4], %s275
        %s277 = sand.u32 %s96, 1
        %s278 = smul.addr %s277, 8
        %s279 = scalar_lea.vmem [#allocation5], %s278
        // Predicated region
        $region37: #{tpu_custom_call.1} parent=31 // pred_check
          %p280 = pneg %p106
        $region38: #{tpu_custom_call.1} parent=31 // pred_check_branch
          %282 = sbr.rel (%p280) target = $region40
        $region39: #{tpu_custom_call.1} parent=31 // pred_region
          %284 = vsyncadd %s276, 0
          %s285 = smul.addr %s20, 2
          %s286 = smul.addr %s285, 4
          %s287 = scalar_lea.hbm %s3, %s286
          %s289 = sshll.u32 %s279, 4
          %s290 = int_to_ptr.vmem [resolvable:$true] %s289
          %s291 = sshll.u32 %s287, 4
          %s292 = int_to_ptr.hbm [resolvable:$true] %s291
          %294 = dma.vmem_to_hbm [thread:$0]  %s290, 128, %s292, %s276
        $region40: #{tpu_custom_call.1} parent=31 // pred_fallthru
          _
      $region32: #{tpu_custom_call.1} parent=5 // pred_fallthru
        _
      %p295 = scmp.le.s32.totalorder 2, %s15
      // Predicated region
      $region41: #{tpu_custom_call.1} parent=5 // pred_check
        %p296 = pneg %p295
      $region42: #{tpu_custom_call.1} parent=5 // pred_check_branch
        %298 = sbr.rel (%p296) target = $region44
      $region43: #{tpu_custom_call.1} parent=5 // pred_region
        %s299 = ssub.s32 %s15, 2
        // Predicated region
        $region45: #{tpu_custom_call.1} parent=43 // pred_check
          %p300 = pneg %p112
        $region46: #{tpu_custom_call.1} parent=43 // pred_check_branch
          %302 = sbr.rel (%p300) target = $region48
        $region47: #{tpu_custom_call.1} parent=43 // pred_region
          %s303 = sand.u32 %s97, 1
          %s304 = scalar_lea.sflag [#allocation4], %s303
          %s305 = sand.u32 %s97, 1
          %s306 = smul.addr %s305, 8
          %s307 = scalar_lea.vmem [#allocation5], %s306
          %309 = dma.done %s304, 128
        $region48: #{tpu_custom_call.1} parent=43 // pred_fallthru
          _
      $region44: #{tpu_custom_call.1} parent=5 // pred_fallthru
        _
    $region6: #{tpu_custom_call.1} parent=1 // loop_footer
      %s19 = sadd.s32 1, %s15
    $region7: #{tpu_custom_call.1} parent=1 // loop_footer_branch
      %14 = sbr.rel target = $region3
    $region8: #{tpu_custom_call.1} parent=1 // loop_exit
      _
    %310 = vsyncpa [#allocation3], 1
    %s311 = scalar_lea.sflag [#allocation3], 1
    %312 = vsyncpa %s311, 1
    %313 = vsyncpa [#allocation4], 1
    %s314 = scalar_lea.sflag [#allocation4], 1
    %315 = vsyncpa %s314, 1

</llo_original>
